<compile_context>
chip_gen: v6e
topology: v6e:2x2x1
jax: 0.10.0
libtpu: 0.0.40
codegen_flags: <defaults>
</compile_context>

<pallas_src>
import jax
import jax.numpy as jnp
from jax.experimental import pallas as pl
from jax.experimental.pallas import tpu as pltpu

_LANE = 128
_SUBLANE = 8
_NEG_BIG = -1e30  # "-inf" stand-in baked into the padded bias lanes


def _round_up(n, m):
    return ((n + m - 1) // m) * m


def _policy_net_kernel(x_ref, w1_ref, b1_ref, w2_ref, b2_ref, out_ref):
    # fc1 + ReLU (MXU matmul, f32 accumulation); cast x to the weight dtype here
    # instead of a separate wrapper pass.
    x = x_ref[...].astype(w1_ref.dtype)
    h = jnp.dot(x, w1_ref[...], preferred_element_type=jnp.float32)
    h = jnp.maximum(h + b1_ref[...], 0.0)

    # fc2: padded w2 columns are zero and padded b2 lanes are _NEG_BIG, so the
    # lane-padding logits come out as _NEG_BIG with no explicit mask needed.
    logits = jnp.dot(h.astype(w2_ref.dtype), w2_ref[...],
                     preferred_element_type=jnp.float32) + b2_ref[...]

    # Numerically-stable softmax over the action axis (PyTorch dim=1).
    # Exact divide: costs one vreg op per 8 rows, keeps rows summing to 1.
    m = jnp.max(logits, axis=-1, keepdims=True)
    e = jnp.exp(logits - m)
    out_ref[...] = e / jnp.sum(e, axis=-1, keepdims=True)


def pack_params(w1, b1, w2, b2, *, matmul_dtype=jnp.bfloat16):
    """One-time parameter packing (do this once, reuse across forward calls):
    cast weights to the MXU dtype, pad action dim to a full 128-lane width, and
    fold the lane mask into the padded bias (_NEG_BIG on padding lanes)."""
    S, H = w1.shape
    H2, A = w2.shape
    assert H == H2
    A_pad = _round_up(A, _LANE)

    w1_c = w1.astype(matmul_dtype)
    b1_r = jnp.reshape(b1, (1, H)).astype(jnp.float32)
    w2_p = jnp.pad(w2, ((0, 0), (0, A_pad - A))).astype(matmul_dtype)
    b2_p = jnp.full((1, A_pad), _NEG_BIG, dtype=jnp.float32)
    b2_p = b2_p.at[0, :A].set(b2.astype(jnp.float32))
    return {"w1": w1_c, "b1": b1_r, "w2": w2_p, "b2": b2_p, "action_dim": A}


def policy_net_forward_packed(x, packed, *, block_m=2048):
    """x: [B, state_dim] float32; packed: output of pack_params().
    Returns probs: [B, action_dim] float32."""
    w1, b1, w2, b2 = packed["w1"], packed["b1"], packed["w2"], packed["b2"]
    A = packed["action_dim"]
    B, S = x.shape
    S2, H = w1.shape
    H2, A_pad = w2.shape
    assert S == S2 and H == H2

    # Balanced batch tiles: avoid the round_up(B, block_m) padding blow-up, and
    # guarantee >=2 grid steps when the batch allows so v7x's two TensorCores
    # both get work (v5e/v6e are unaffected).
    B8 = _round_up(B, _SUBLANE)
    min_steps = 2 if B8 >= 2 * _SUBLANE else 1
    n_steps = max(min_steps, pl.cdiv(B8, block_m))
    TM = _round_up(pl.cdiv(B8, n_steps), _SUBLANE)
    grid_m = pl.cdiv(B8, TM)
    B_pad = TM * grid_m

    x_in = x if B_pad == B else jnp.pad(x, ((0, B_pad - B), (0, 0)))

    cost = pl.CostEstimate(
        flops=2 * B_pad * (S * H + H * A_pad),
        transcendentals=B_pad * A_pad,
        bytes_accessed=int(
            x_in.size * x_in.dtype.itemsize
            + w1.size * w1.dtype.itemsize
            + w2.size * w2.dtype.itemsize
            + (b1.size + b2.size) * 4
            + B_pad * A_pad * 4),
    )

    # Rough per-step VMEM: double-buffered x/out tiles + f32 temporaries + weights.
    vmem_est = (2 * TM * (A_pad * 4 + S * x_in.dtype.itemsize)
                + 4 * TM * (H + 2 * A_pad)
                + (w1.size + w2.size) * w1.dtype.itemsize
                + (b1.size + b2.size) * 4)
    compiler_kwargs = dict(dimension_semantics=("parallel",))
    if vmem_est > 12 * 1024 * 1024:  # only raise the scoped limit when needed (v5e default 16 MiB)
        compiler_kwargs["vmem_limit_bytes"] = min(int(2 * vmem_est), 100 * 1024 * 1024)

    out = pl.pallas_call(
        _policy_net_kernel,
        out_shape=jax.ShapeDtypeStruct((B_pad, A_pad), jnp.float32),
        grid=(grid_m,),
        in_specs=[
            pl.BlockSpec((TM, S), lambda i: (i, 0)),       # x tiles stream / auto-pipeline
            pl.BlockSpec((S, H), lambda i: (0, 0)),        # weights stay VMEM-resident
            pl.BlockSpec((1, H), lambda i: (0, 0)),
            pl.BlockSpec((H, A_pad), lambda i: (0, 0)),
            pl.BlockSpec((1, A_pad), lambda i: (0, 0)),
        ],
        out_specs=pl.BlockSpec((TM, A_pad), lambda i: (i, 0)),
        compiler_params=pltpu.CompilerParams(**compiler_kwargs),
        cost_estimate=cost,
    )(x_in, w1, b1, w2, b2)

    # TODO(synk): for very large B the padded f32 writeback (128 lanes for 4
    # useful actions) dominates HBM bytes; pack probs to a lane-dense layout or
    # emit bf16 if the consumer allows.
    return out[:B, :A]


def policy_net_forward(x, w1, b1, w2, b2, *, block_m=2048):
    """Convenience one-shot path (packs params on every call; prefer packing once)."""
    return policy_net_forward_packed(x, pack_params(w1, b1, w2, b2), block_m=block_m)


def init_params(key, state_dim, hidden_dim, action_dim):
    """PyTorch nn.Linear default init: U(-1/sqrt(fan_in), 1/sqrt(fan_in)).
    Weights stored already-transposed as [in_features, out_features]."""
    k1, k2, k3, k4 = jax.random.split(key, 4)
    bound1 = 1.0 / (state_dim ** 0.5)
    bound2 = 1.0 / (hidden_dim ** 0.5)
    w1 = jax.random.uniform(k1, (state_dim, hidden_dim), jnp.float32, -bound1, bound1)
    b1 = jax.random.uniform(k2, (hidden_dim,), jnp.float32, -bound1, bound1)
    w2 = jax.random.uniform(k3, (hidden_dim, action_dim), jnp.float32, -bound2, bound2)
    b2 = jax.random.uniform(k4, (action_dim,), jnp.float32, -bound2, bound2)
    return w1, b1, w2, b2


if __name__ == "__main__":
    state_dim, hidden_dim, action_dim = 8, 32, 4

    key = jax.random.PRNGKey(0)
    kx, kp, kx2 = jax.random.split(key, 3)
    w1, b1, w2, b2 = init_params(kp, state_dim, hidden_dim, action_dim)
    packed = pack_params(w1, b1, w2, b2)  # pack once, reuse across calls

    # Pure-JAX reference with the same bf16 matmul casting.
    def ref(x):
        h = jnp.dot(x.astype(jnp.bfloat16), w1.astype(jnp.bfloat16),
                    preferred_element_type=jnp.float32) + b1.reshape(1, -1)
        h = jnp.maximum(h, 0.0)
        logits = jnp.dot(h.astype(jnp.bfloat16), w2.astype(jnp.bfloat16),
                         preferred_element_type=jnp.float32) + b2.reshape(1, -1)
        return jax.nn.softmax(logits, axis=1)

    # Small batch (single grid step path).
    x = jax.random.normal(kx, (2, state_dim), jnp.float32)
    probs = policy_net_forward_packed(x, packed)
    jax.block_until_ready(probs)
    assert probs.shape == (2, action_dim)
    assert bool(jnp.all(jnp.abs(jnp.sum(probs, axis=1) - 1.0) < 1e-5)), jnp.sum(probs, 1)
    assert bool(jnp.all(jnp.abs(probs - ref(x)) < 5e-3))

    # Ragged batch (exercises balanced multi-step tiling / v7x two-TC path).
    x2 = jax.random.normal(kx2, (50, state_dim), jnp.float32)
    probs2 = policy_net_forward_packed(x2, packed)
    jax.block_until_ready(probs2)
    assert probs2.shape == (50, action_dim)
    assert bool(jnp.all(jnp.abs(jnp.sum(probs2, axis=1) - 1.0) < 1e-5))
    assert bool(jnp.all(jnp.abs(probs2 - ref(x2)) < 5e-3))

    print("KERNEL_OK")
</pallas_src>

<mosaic_0001>
module attributes {stable_mosaic.version = 11 : i64} {
  func.func @_policy_net_kernel(%arg0: i32, %arg1: memref<8x8xf32, #tpu.memory_space<vmem>>, %arg2: memref<8x32xbf16, #tpu.memory_space<vmem>>, %arg3: memref<1x32xf32, #tpu.memory_space<vmem>>, %arg4: memref<32x128xbf16, #tpu.memory_space<vmem>>, %arg5: memref<1x128xf32, #tpu.memory_space<vmem>>, %arg6: memref<8x128xf32, #tpu.memory_space<vmem>>) attributes {dimension_semantics = [#tpu.dimension_semantics<parallel>], iteration_bounds = array<i64: 1>, scalar_prefetch = 0 : i64, scratch_operands = 0 : i64, tpu.core_type = #tpu.core_type<tc>, window_params = [{transform_indices = @transform_0, window_bounds = array<i64: 8, 8>}, {pipeline_mode = #tpu.pipeline_mode<synchronous>, transform_indices = @transform_1, window_bounds = array<i64: 8, 32>}, {pipeline_mode = #tpu.pipeline_mode<synchronous>, transform_indices = @transform_2, window_bounds = array<i64: 1, 32>}, {pipeline_mode = #tpu.pipeline_mode<synchronous>, transform_indices = @transform_3, window_bounds = array<i64: 32, 128>}, {pipeline_mode = #tpu.pipeline_mode<synchronous>, transform_indices = @transform_4, window_bounds = array<i64: 1, 128>}, {transform_indices = @transform_5, window_bounds = array<i64: 8, 128>}]} {
    %c0 = arith.constant 0 : index
    %c0_0 = arith.constant 0 : index
    %0 = vector.load %arg1[%c0, %c0_0] : memref<8x8xf32, #tpu.memory_space<vmem>>, vector<8x8xf32>
    %1 = arith.truncf %0 : vector<8x8xf32> to vector<8x8xbf16>
    %c0_1 = arith.constant 0 : index
    %c0_2 = arith.constant 0 : index
    %2 = vector.load %arg2[%c0_1, %c0_2] : memref<8x32xbf16, #tpu.memory_space<vmem>>, vector<8x32xbf16>
    %cst = arith.constant dense<0.000000e+00> : vector<8x32xf32>
    %3 = tpu.matmul %1, %2, %cst {dimension_numbers = #tpu.dot_dimension_numbers<[1], [0], [0], [1], [0, 0, 1, 1], [], []>} : vector<8x8xbf16>, vector<8x32xbf16>, vector<8x32xf32> -> vector<8x32xf32>
    %c0_3 = arith.constant 0 : index
    %c0_4 = arith.constant 0 : index
    %4 = vector.load %arg3[%c0_3, %c0_4] : memref<1x32xf32, #tpu.memory_space<vmem>>, vector<1x32xf32>
    %5 = vector.broadcast %4 : vector<1x32xf32> to vector<8x32xf32>
    %6 = arith.addf %3, %5 : vector<8x32xf32>
    %cst_5 = arith.constant 0.000000e+00 : f32
    %7 = vector.broadcast %cst_5 : f32 to vector<8x32xf32>
    %8 = arith.maximumf %6, %7 : vector<8x32xf32>
    %9 = arith.truncf %8 : vector<8x32xf32> to vector<8x32xbf16>
    %c0_6 = arith.constant 0 : index
    %c0_7 = arith.constant 0 : index
    %10 = vector.load %arg4[%c0_6, %c0_7] : memref<32x128xbf16, #tpu.memory_space<vmem>>, vector<32x128xbf16>
    %cst_8 = arith.constant dense<0.000000e+00> : vector<8x128xf32>
    %11 = tpu.matmul %9, %10, %cst_8 {dimension_numbers = #tpu.dot_dimension_numbers<[1], [0], [0], [1], [0, 0, 1, 1], [], []>} : vector<8x32xbf16>, vector<32x128xbf16>, vector<8x128xf32> -> vector<8x128xf32>
    %c0_9 = arith.constant 0 : index
    %c0_10 = arith.constant 0 : index
    %12 = vector.load %arg5[%c0_9, %c0_10] : memref<1x128xf32, #tpu.memory_space<vmem>>, vector<1x128xf32>
    %13 = vector.broadcast %12 : vector<1x128xf32> to vector<8x128xf32>
    %14 = arith.addf %11, %13 : vector<8x128xf32>
    %cst_11 = arith.constant dense<0xFF800000> : vector<8xf32>
    %15 = vector.multi_reduction <maximumf>, %14, %cst_11 [1] : vector<8x128xf32> to vector<8xf32>
    %16 = vector.shape_cast %15 : vector<8xf32> to vector<8x1xf32>
    %17 = vector.broadcast %16 : vector<8x1xf32> to vector<8x128xf32>
    %18 = arith.subf %14, %17 : vector<8x128xf32>
    %19 = math.exp %18 : vector<8x128xf32>
    %cst_12 = arith.constant dense<0.000000e+00> : vector<8xf32>
    %20 = vector.multi_reduction <add>, %19, %cst_12 [1] : vector<8x128xf32> to vector<8xf32>
    %21 = vector.shape_cast %20 : vector<8xf32> to vector<8x1xf32>
    %22 = vector.broadcast %21 : vector<8x1xf32> to vector<8x128xf32>
    %23 = arith.divf %19, %22 : vector<8x128xf32>
    %c0_13 = arith.constant 0 : index
    %c0_14 = arith.constant 0 : index
    %24 = vector.load %arg6[%c0_13, %c0_14] : memref<8x128xf32, #tpu.memory_space<vmem>>, vector<8x128xf32>
    tpu.vector_store %arg6[%c0_13, %c0_14], %23 {strides = array<i32>} : memref<8x128xf32, #tpu.memory_space<vmem>>, vector<8x128xf32>,
    return
  }
  func.func @transform_0(%arg0: i32) -> (i32, i32) {
    %c0_i32 = arith.constant 0 : i32
    %c0_i32_0 = arith.constant 0 : i32
    return %arg0, %c0_i32 : i32, i32
  }
  func.func @transform_1(%arg0: i32) -> (i32, i32) {
    %c0_i32 = arith.constant 0 : i32
    %c0_i32_0 = arith.constant 0 : i32
    %c0_i32_1 = arith.constant 0 : i32
    return %c0_i32, %c0_i32_0 : i32, i32
  }
  func.func @transform_2(%arg0: i32) -> (i32, i32) {
    %c0_i32 = arith.constant 0 : i32
    %c0_i32_0 = arith.constant 0 : i32
    %c0_i32_1 = arith.constant 0 : i32
    return %c0_i32, %c0_i32_0 : i32, i32
  }
  func.func @transform_3(%arg0: i32) -> (i32, i32) {
    %c0_i32 = arith.constant 0 : i32
    %c0_i32_0 = arith.constant 0 : i32
    %c0_i32_1 = arith.constant 0 : i32
    return %c0_i32, %c0_i32_0 : i32, i32
  }
  func.func @transform_4(%arg0: i32) -> (i32, i32) {
    %c0_i32 = arith.constant 0 : i32
    %c0_i32_0 = arith.constant 0 : i32
    %c0_i32_1 = arith.constant 0 : i32
    return %c0_i32, %c0_i32_0 : i32, i32
  }
  func.func @transform_5(%arg0: i32) -> (i32, i32) {
    %c0_i32 = arith.constant 0 : i32
    %c0_i32_0 = arith.constant 0 : i32
    return %arg0, %c0_i32 : i32, i32
  }
}

</mosaic_0001>

<llo_original>
// kernel: tpu_custom_call.1
$region0: #{tpu_custom_call.1}
  #allocation0 [shape = 'u32[]', space=smem, size = 0x4, offset = 0x4, fixed_abs, tag = 'smem constant byte address 0x4 - core index']
  #allocation1 [shape = 'u32[144,128]{1,0:T(1,128)}', space=vmem, size = 0x12000, scoped, tag = 'internal scratch']
  %s0 = inlined_call_operand.hbm [shape: f32[8,8], index: 0, kind: input, shape index: {}]
  %s1 = inlined_call_operand.hbm [shape: bf16[8,32], index: 1, kind: input, shape index: {}]
  %s2 = inlined_call_operand.vmem [shape: f32[1,32], index: 2, kind: input, shape index: {}]
  %s3 = inlined_call_operand.hbm [shape: bf16[32,128], index: 3, kind: input, shape index: {}]
  %s4 = inlined_call_operand.vmem [shape: f32[1,128], index: 4, kind: input, shape index: {}]
  %s5 = inlined_call_operand.hbm [shape: f32[8,128], index: 5, kind: output, shape index: {}]
  %s6 = sld [smem:[#allocation0]]
  $region42: #{tpu_custom_call.1} parent=0
    _
  %s8 = ssub.s32 1, %s6
  %s9 = scalar_select 0, %s8, %s6
  $region1: #{tpu_custom_call.1} parent=0
    #allocation2 [shape = 'u8[4096]{0}', space=vmem, size = 0x1000, scoped, tag = 'input window, operand 0, single buffered']
    #allocation3 [shape = 's32[1]{0}', space=sflag, size = 0x4, scoped, tag = 'scoped memory for tpu_custom_call.1']
    #allocation4 [shape = 's32[1]{0}', space=sflag, size = 0x4, scoped, tag = 'scoped memory for tpu_custom_call.1']
    #allocation5 [shape = 'u8[2048]{0}', space=vmem, size = 0x800, scoped, tag = 'input window, operand 1, single buffered']
    #allocation6 [shape = 's32[1]{0}', space=sflag, size = 0x4, scoped, tag = 'scoped memory for tpu_custom_call.1']
    #allocation7 [shape = 'u8[8192]{0}', space=vmem, size = 0x2000, scoped, tag = 'input window, operand 3, single buffered']
    #allocation8 [shape = 'u8[4096]{0}', space=vmem, size = 0x1000, scoped, tag = 'output window, operand 0, single buffered']
    %10 = vsyncpa [#allocation3], 0
    %11 = vsyncpa [#allocation6], 0
    %12 = vsyncpa [#allocation4], 0
    // Predicated region
    $region2: #{tpu_custom_call.1} parent=1 // pred_check
      _
    $region3: #{tpu_custom_call.1} parent=1 // pred_check_branch
      %14 = sbr.rel (0) target = $region5
    $region4: #{tpu_custom_call.1} parent=1 // pred_region
      %s16 = ssub.s32 128, 128
      %17 = vsyncadd [#allocation3], %s16
      %s19 = sshll.u32 [#allocation2], 4
      %s20 = int_to_ptr.vmem [resolvable:$true] %s19
      %22 = dma.hbm_to_vmem [thread:$0]  %s0, 128, %s20, [#allocation3]
    $region5: #{tpu_custom_call.1} parent=1 // pred_fallthru
      _
    // Predicated region
    $region6: #{tpu_custom_call.1} parent=1 // pred_check
      _
    $region7: #{tpu_custom_call.1} parent=1 // pred_check_branch
      %24 = sbr.rel (0) target = $region9
    $region8: #{tpu_custom_call.1} parent=1 // pred_region
      %s26 = ssub.s32 64, 64
      %27 = vsyncadd [#allocation6], %s26
      %s29 = sshll.u32 [#allocation5], 4
      %s30 = int_to_ptr.vmem [resolvable:$true] %s29
      %32 = dma.hbm_to_vmem [thread:$0]  %s1, 64, %s30, [#allocation6]
    $region9: #{tpu_custom_call.1} parent=1 // pred_fallthru
      _
    // Predicated region
    $region10: #{tpu_custom_call.1} parent=1 // pred_check
      _
    $region11: #{tpu_custom_call.1} parent=1 // pred_check_branch
      %34 = sbr.rel (0) target = $region13
    $region12: #{tpu_custom_call.1} parent=1 // pred_region
      _
    $region13: #{tpu_custom_call.1} parent=1 // pred_fallthru
      _
    // Predicated region
    $region14: #{tpu_custom_call.1} parent=1 // pred_check
      _
    $region15: #{tpu_custom_call.1} parent=1 // pred_check_branch
      %36 = sbr.rel (0) target = $region17
    $region16: #{tpu_custom_call.1} parent=1 // pred_region
      %s38 = ssub.s32 256, 256
      %39 = vsyncadd [#allocation6], %s38
      %s40 = sshll.u32 [#allocation7], 4
      %s41 = int_to_ptr.vmem [resolvable:$true] %s40
      %46 = dma.hbm_to_vmem [thread:$0]  %s3, 256, %s41, [#allocation6], 64, 64, 4
    $region17: #{tpu_custom_call.1} parent=1 // pred_fallthru
      _
    // Predicated region
    $region18: #{tpu_custom_call.1} parent=1 // pred_check
      _
    $region19: #{tpu_custom_call.1} parent=1 // pred_check_branch
      %48 = sbr.rel (0) target = $region21
    $region20: #{tpu_custom_call.1} parent=1 // pred_region
      _
    $region21: #{tpu_custom_call.1} parent=1 // pred_fallthru
      _
    // Predicated region
    $region22: #{tpu_custom_call.1} parent=1 // pred_check
      _
    $region23: #{tpu_custom_call.1} parent=1 // pred_check_branch
      %50 = sbr.rel (0) target = $region25
    $region24: #{tpu_custom_call.1} parent=1 // pred_region
      %51 = dma.done [#allocation3], 128
    $region25: #{tpu_custom_call.1} parent=1 // pred_fallthru
      _
    // Predicated region
    $region26: #{tpu_custom_call.1} parent=1 // pred_check
      _
    $region27: #{tpu_custom_call.1} parent=1 // pred_check_branch
      %53 = sbr.rel (0) target = $region29
    $region28: #{tpu_custom_call.1} parent=1 // pred_region
      %54 = dma.done [#allocation6], 64
    $region29: #{tpu_custom_call.1} parent=1 // pred_fallthru
      _
    // Predicated region
    $region30: #{tpu_custom_call.1} parent=1 // pred_check
      _
    $region31: #{tpu_custom_call.1} parent=1 // pred_check_branch
      %56 = sbr.rel (0) target = $region33
    $region32: #{tpu_custom_call.1} parent=1 // pred_region
      %57 = dma.done [#allocation6], 256
    $region33: #{tpu_custom_call.1} parent=1 // pred_fallthru
      _
    %v59 = vld [vmem:[#allocation2] sm:$0xff]
    %v60 = vpack.c.bf16 %v59, %v59
    %v61 = vld [vmem:[#allocation5] sm:$0xf]
    %v62 = vld [vmem:[%s2] sm:$0x1]
    %v64 = vlaneseq
    %v65 = vshrl.u32 %v64, 7
    %v66 = vsub.s32 0, %v65
    %v67 = vrot.slane %v62, %v66
    %vm69 = vcmask 64512
    %v71 = vsel %vm69, %v60, 0
    %vm73 = vcmask 1043456
    %v75 = vsel %vm73, %v61, 0
    %77 = vmatprep.subr.bf16.mxu0 0
    %78 = vmatpush1.bf16.msra.mxu0 0
    %79 = vmatprep.subr.bf16.mxu0 0
    %80 = vmatpush1.bf16.msra.mxu0 0
    %81 = vmatprep.subr.bf16.mxu0 0
    %82 = vmatpush1.bf16.msra.mxu0 0
    %83 = vmatprep.subr.bf16.mxu0 0
    %84 = vmatpush1.bf16.msra.mxu0 0
    %85 = vmatprep.subr.bf16.mxu0 0
    %86 = vmatpush1.bf16.msra.mxu0 0
    %87 = vmatprep.subr.bf16.mxu0 0
    %88 = vmatpush1.bf16.msra.mxu0 0
    %89 = vmatprep.subr.bf16.mxu0 0
    %90 = vmatpush1.bf16.msra.mxu0 0
    %91 = vmatprep.subr.bf16.mxu0 0
    %92 = vmatpush1.bf16.msra.mxu0 %v75
    %93 = vmatprep.subr.bf16.mxu0 0
    %94 = vmatpush2.bf16.msra.mxu0 0
    %95 = vmatprep.subr.bf16.mxu0 0
    %96 = vmatpush2.bf16.msra.mxu0 0
    %97 = vmatprep.subr.bf16.mxu0 0
    %98 = vmatpush2.bf16.msra.mxu0 0
    %99 = vmatprep.subr.bf16.mxu0 0
    %100 = vmatpush2.bf16.msra.mxu0 0
    %101 = vmatprep.subr.bf16.mxu0 0
    %102 = vmatpush2.bf16.msra.mxu0 0
    %103 = vmatprep.subr.bf16.mxu0 0
    %104 = vmatpush2.bf16.msra.mxu0 0
    %105 = vmatprep.subr.bf16.mxu0 0
    %106 = vmatpush2.bf16.msra.mxu0 0
    %107 = vmatprep.subr.bf16.mxu0 0
    %108 = vmatpush2.bf16.msra.mxu0 0
    %109 = vmatprep.mubr.bf16.mxu0 0
    %110 = vmatmul.mubr.bf16.gmra.mxu0 %v71
    %v111 = vpop.f32.mrf.mxu0
    %v112 = vadd.f32 %v67, %v111
    %v113 = vpop.f32.mrf.mxu0
    %v114 = vpop.f32.mrf.mxu0
    %v115 = vpop.f32.mrf.mxu0
    %116 = vdwg.mxu0
    %v117 = vmax.f32 %v112, 0.0
    %v118 = vpack.c.bf16 %v117, %v117
    %v119 = vld [vmem:[#allocation7] sm:$0xf]
    %v120 = vld [vmem:[#allocation7 + $0x4] sm:$0xf]
    %v121 = vld [vmem:[#allocation7 + $0x8] sm:$0xf]
    %v122 = vld [vmem:[#allocation7 + $0xc] sm:$0xf]
    %v123 = vld [vmem:[%s4] sm:$0x1]
    %v125 = vlaneseq
    %v126 = vshrl.u32 %v125, 7
    %v127 = vsub.s32 0, %v126
    %v128 = vrot.slane %v123, %v127
    %v134 = vunpack.c.l.b16 %v119
    %v135 = vunpack.c.l.b16 %v120
    %v136 = vunpack.c.l.b16 %v121
    %v137 = vunpack.c.l.b16 %v122
    %v138 = vpack.c.b16 %v135, %v134
    %v139 = vpack.c.b16 %v137, %v136
    %vm142 = vcmask 261120
    %v144 = vsel %vm142, %v118, 0
    %146 = vmatprep.subr.bf16.mxu0 0
    %147 = vmatpush1.bf16.msra.mxu0 0
    %148 = vmatprep.subr.bf16.mxu0 0
    %149 = vmatpush1.bf16.msra.mxu0 0
    %150 = vmatprep.subr.bf16.mxu0 0
    %151 = vmatpush1.bf16.msra.mxu0 0
    %152 = vmatprep.subr.bf16.mxu0 0
    %153 = vmatpush1.bf16.msra.mxu0 0
    %154 = vmatprep.subr.bf16.mxu0 0
    %155 = vmatpush1.bf16.msra.mxu0 0
    %156 = vmatprep.subr.bf16.mxu0 0
    %157 = vmatpush1.bf16.msra.mxu0 0
    %158 = vmatprep.subr.bf16.mxu0 0
    %159 = vmatpush1.bf16.msra.mxu0 %v139
    %160 = vmatprep.subr.bf16.mxu0 0
    %161 = vmatpush1.bf16.msra.mxu0 %v138
    %162 = vmatprep.subr.bf16.mxu0 0
    %163 = vmatpush2.bf16.msra.mxu0 0
    %164 = vmatprep.subr.bf16.mxu0 0
    %165 = vmatpush2.bf16.msra.mxu0 0
    %166 = vmatprep.subr.bf16.mxu0 0
    %167 = vmatpush2.bf16.msra.mxu0 0
    %168 = vmatprep.subr.bf16.mxu0 0
    %169 = vmatpush2.bf16.msra.mxu0 0
    %170 = vmatprep.subr.bf16.mxu0 0
    %171 = vmatpush2.bf16.msra.mxu0 0
    %172 = vmatprep.subr.bf16.mxu0 0
    %173 = vmatpush2.bf16.msra.mxu0 0
    %174 = vmatprep.subr.bf16.mxu0 0
    %175 = vmatpush2.bf16.msra.mxu0 0
    %176 = vmatprep.subr.bf16.mxu0 0
    %177 = vmatpush2.bf16.msra.mxu0 0
    %178 = vmatprep.mubr.bf16.mxu0 0
    %179 = vmatmul.mubr.bf16.gmra.mxu0 %v144
    %v180 = vpop.f32.mrf.mxu0
    %v181 = vadd.f32 %v128, %v180
    %v182 = vpop.f32.mrf.mxu0
    %v183 = vpop.f32.mrf.mxu0
    %v184 = vpop.f32.mrf.mxu0
    %185 = vdwg.mxu0
    %186 = vmax.xlane.f32.xlu0 %v181
    %v187 = vpop.xlane.xlu0 %186
    %v188 = vsub.f32 %v181, %v187
    %v189 = vmul.f32 %v188, 1.442695
    %v190 = vpow.pop %v189
    %191 = vadd.xlane.f32.xlu0 %v190
    %v192 = vpop.xlane.xlu0 %191
    %v193 = vrcp.pop %v192
    %v194 = vmul.f32 %v190, %v193
    %195 = vst [vmem:[#allocation8] sm:$0xff] %v194
    // Predicated region
    $region34: #{tpu_custom_call.1} parent=1 // pred_check
      _
    $region35: #{tpu_custom_call.1} parent=1 // pred_check_branch
      %197 = sbr.rel (0) target = $region37
    $region36: #{tpu_custom_call.1} parent=1 // pred_region
      %s199 = ssub.s32 128, 128
      %200 = vsyncadd [#allocation4], %s199
      %s202 = sshll.u32 [#allocation8], 4
      %s203 = int_to_ptr.vmem [resolvable:$true] %s202
      %205 = dma.vmem_to_hbm [thread:$0]  %s203, 128, %s5, [#allocation4]
    $region37: #{tpu_custom_call.1} parent=1 // pred_fallthru
      _
    // Predicated region
    $region38: #{tpu_custom_call.1} parent=1 // pred_check
      _
    $region39: #{tpu_custom_call.1} parent=1 // pred_check_branch
      %207 = sbr.rel (0) target = $region41
    $region40: #{tpu_custom_call.1} parent=1 // pred_region
      %208 = dma.done [#allocation4], 128
    $region41: #{tpu_custom_call.1} parent=1 // pred_fallthru
      _
    %209 = vsyncpa [#allocation3], 1
    %210 = vsyncpa [#allocation6], 1
    %211 = vsyncpa [#allocation4], 1

</llo_original>
